<compile_context>
chip_gen: v7x
topology: tpu7x:2x2x1
jax: 0.10.0
libtpu: 0.0.40
codegen_flags: <defaults>
</compile_context>

<pallas_src>
import jax
import jax.numpy as jnp
from jax.experimental import pallas as pl
from jax.experimental.pallas import tpu as pltpu


def _round_up(x, m):
    return ((x + m - 1) // m) * m


def _round_down(x, m):
    return (x // m) * m


def mlp_kernel(x_ref, w1_ref, b1_ref, w2_ref, b2_ref, o_ref):
    # x: (TB, D)  w1: (D, H)  b1: (1, H)  w2: (1, H)  b2: SMEM (1,)  o: (TB, 1)
    x = x_ref[...]
    # First layer on the MXU (f32 operands, default precision -> same math as the
    # XLA reference the test compares against).
    h = jnp.dot(x, w1_ref[...], preferred_element_type=jnp.float32)
    h = jnp.maximum(h + b1_ref[...], 0.0)                       # bias + ReLU (VPU)
    # Second layer (15 -> 1) as a VPU broadcast-multiply + lane reduction; an N=1 MXU
    # matmul would waste nearly all output lanes and the result-FIFO drain.
    y = jnp.sum(h * w2_ref[...], axis=-1, keepdims=True) + b2_ref[0]
    o_ref[...] = y.astype(o_ref.dtype)


def _default_block_rows(D):
    """Byte-targeted batch tile.

    Worst-case VMEM bytes per batch row, assuming every VMEM buffer's minor dim is
    lane-padded to a multiple of 128:
      x   : 2 pipeline buffers + ~1 in-kernel temp -> 3 * 4*round_up(D,128)
      h   : bias/relu/mul temps (width 15 -> 128)  -> 3 * 512
      out : 2 pipeline buffers (width 1 -> 128)    -> 2 * 512
    A 24 MiB budget keeps comfortable headroom under the 32 MiB scoped VMEM limit on
    every generation (v7x included) while making each grid step move enough x bytes
    that the ~0.35 us per-step overhead is amortized.
    """
    x_row = 4 * _round_up(D, 128)
    row_bytes = 3 * x_row + 3 * 512 + 2 * 512
    budget = 24 * 1024 * 1024
    tb = _round_down(budget // row_bytes, 128)
    return int(min(max(tb, 256), 32768))


def pytorch_reg_forward(x, w1, b1, w2, b2, *, block_rows=None):
    """x: (B, D) f32. w1: (15, D), b1: (15,), w2: (1, 15), b2: (1,) (PyTorch layout)."""
    x = jnp.asarray(x, jnp.float32)
    B, D = x.shape
    H = w1.shape[0]  # 15

    # PyTorch (out, in) -> (in, out); biases/row-weights to kernel-friendly 2D layouts.
    w1_t = jnp.asarray(w1, jnp.float32).T             # (D, H)
    b1_2d = jnp.asarray(b1, jnp.float32).reshape(1, H)
    w2_row = jnp.asarray(w2, jnp.float32).reshape(1, H)
    b2_s = jnp.asarray(b2, jnp.float32).reshape(1)    # scalar, lives in SMEM

    if block_rows is None:
        tb = _default_block_rows(D)                   # e.g. 6144 rows for D=32
    else:
        tb = max(_round_down(int(block_rows), 8), 8)
    # Never use a block larger than (sublane-rounded) B; keeps small batches one-step.
    tb = min(tb, _round_up(B, 8))

    grid = pl.cdiv(B, tb)  # ragged last block is masked by Pallas (no jnp.pad pass)

    out = pl.pallas_call(
        mlp_kernel,
        out_shape=jax.ShapeDtypeStruct((B, 1), jnp.float32),
        grid=(grid,),
        in_specs=[
            pl.BlockSpec((tb, D), lambda i: (i, 0)),            # streamed batch tiles
            pl.BlockSpec((D, H), lambda i: (0, 0)),             # resident across grid
            pl.BlockSpec((1, H), lambda i: (0, 0)),             # resident
            pl.BlockSpec((1, H), lambda i: (0, 0)),             # resident
            pl.BlockSpec(memory_space=pltpu.MemorySpace.SMEM),  # b2 scalar in SMEM
        ],
        out_specs=pl.BlockSpec((tb, 1), lambda i: (i, 0)),
        compiler_params=pltpu.CompilerParams(
            dimension_semantics=("parallel",),   # megacore sharding on v7x; safe elsewhere
            vmem_limit_bytes=32 * 1024 * 1024,   # raises v5e's 16 MiB scoped default
        ),
    )(x, w1_t, b1_2d, w2_row, b2_s)
    return out


def init_params(key, input_size, layer_size=15):
    """Deterministic synthetic params matching nn.Linear shapes (out, in) + (out,)."""
    k1, k2, k3, k4 = jax.random.split(key, 4)
    bound1 = 1.0 / jnp.sqrt(input_size)
    bound2 = 1.0 / jnp.sqrt(layer_size)
    w1 = jax.random.uniform(k1, (layer_size, input_size), jnp.float32, -bound1, bound1)
    b1 = jax.random.uniform(k2, (layer_size,), jnp.float32, -bound1, bound1)
    w2 = jax.random.uniform(k3, (1, layer_size), jnp.float32, -bound2, bound2)
    b2 = jax.random.uniform(k4, (1,), jnp.float32, -bound2, bound2)
    return w1, b1, w2, b2


if __name__ == "__main__":
    key = jax.random.PRNGKey(0)
    kx1, kx2, kx3, kp = jax.random.split(key, 4)

    input_size = 32
    w1, b1, w2, b2 = init_params(kp, input_size)

    def ref_fn(x):
        # Same math as the PyTorch module: relu(x @ W1.T + b1) @ W2.T + b2
        return jnp.maximum(x @ w1.T + b1, 0.0) @ w2.T + b2

    # Small shape consistent with the module's usage: (batch=8, input_size=32).
    x_small = jax.random.normal(kx1, (8, input_size), jnp.float32)
    out_small = jax.block_until_ready(pytorch_reg_forward(x_small, w1, b1, w2, b2))
    assert out_small.shape == (8, 1)
    assert jnp.allclose(out_small, ref_fn(x_small), atol=1e-5, rtol=1e-5)

    # Medium batch: default path, single exact block (no padding anywhere).
    x_med = jax.random.normal(kx2, (1000, input_size), jnp.float32)
    out_med = jax.block_until_ready(pytorch_reg_forward(x_med, w1, b1, w2, b2))
    assert out_med.shape == (1000, 1)
    assert jnp.allclose(out_med, ref_fn(x_med), atol=1e-4, rtol=1e-4)

    # Forced small block: grid=2 with a ragged (Pallas-masked) last block, verifying
    # the no-pad ragged path requested by the perf review.
    out_rag = jax.block_until_ready(
        pytorch_reg_forward(x_med, w1, b1, w2, b2, block_rows=512))
    assert out_rag.shape == (1000, 1)
    assert jnp.allclose(out_rag, ref_fn(x_med), atol=1e-4, rtol=1e-4)

    # Larger batch: default byte-targeted tile (tb=6144 for D=32) -> multi-step
    # pipelined grid with a ragged last block.
    x_big = jax.random.normal(kx3, (30000, input_size), jnp.float32)
    out_big = jax.block_until_ready(pytorch_reg_forward(x_big, w1, b1, w2, b2))
    assert out_big.shape == (30000, 1)
    assert jnp.allclose(out_big, ref_fn(x_big), atol=1e-4, rtol=1e-4)

    print("KERNEL_OK")
</pallas_src>

<mosaic_0001>
module attributes {stable_mosaic.version = 11 : i64} {
  func.func @mlp_kernel(%arg0: i32, %arg1: memref<8x32xf32, #tpu.memory_space<vmem>>, %arg2: memref<32x15xf32, #tpu.memory_space<vmem>>, %arg3: memref<1x15xf32, #tpu.memory_space<vmem>>, %arg4: memref<1x15xf32, #tpu.memory_space<vmem>>, %arg5: memref<1xf32, #tpu.memory_space<smem>>, %arg6: memref<8x1xf32, #tpu.memory_space<vmem>>) attributes {dimension_semantics = [#tpu.dimension_semantics<parallel>], iteration_bounds = array<i64: 1>, scalar_prefetch = 0 : i64, scratch_operands = 0 : i64, tpu.core_type = #tpu.core_type<tc>, window_params = [{transform_indices = @transform_0, window_bounds = array<i64: 8, 32>}, {pipeline_mode = #tpu.pipeline_mode<synchronous>, transform_indices = @transform_1, window_bounds = array<i64: 32, 15>}, {pipeline_mode = #tpu.pipeline_mode<synchronous>, transform_indices = @transform_2, window_bounds = array<i64: 1, 15>}, {pipeline_mode = #tpu.pipeline_mode<synchronous>, transform_indices = @transform_3, window_bounds = array<i64: 1, 15>}, {transform_indices = @transform_4, window_bounds = array<i64: 1>}, {transform_indices = @transform_5, window_bounds = array<i64: 8, 1>}]} {
    %c0 = arith.constant 0 : index
    %c0_0 = arith.constant 0 : index
    %0 = vector.load %arg1[%c0, %c0_0] : memref<8x32xf32, #tpu.memory_space<vmem>>, vector<8x32xf32>
    %c0_1 = arith.constant 0 : index
    %c0_2 = arith.constant 0 : index
    %1 = vector.load %arg2[%c0_1, %c0_2] : memref<32x15xf32, #tpu.memory_space<vmem>>, vector<32x15xf32>
    %cst = arith.constant dense<0.000000e+00> : vector<8x15xf32>
    %2 = tpu.matmul %0, %1, %cst {dimension_numbers = #tpu.dot_dimension_numbers<[1], [0], [0], [1], [0, 0, 1, 1], [], []>} : vector<8x32xf32>, vector<32x15xf32>, vector<8x15xf32> -> vector<8x15xf32>
    %c0_3 = arith.constant 0 : index
    %c0_4 = arith.constant 0 : index
    %3 = vector.load %arg3[%c0_3, %c0_4] : memref<1x15xf32, #tpu.memory_space<vmem>>, vector<1x15xf32>
    %4 = vector.broadcast %3 : vector<1x15xf32> to vector<8x15xf32>
    %5 = arith.addf %2, %4 : vector<8x15xf32>
    %cst_5 = arith.constant 0.000000e+00 : f32
    %6 = vector.broadcast %cst_5 : f32 to vector<8x15xf32>
    %7 = arith.maximumf %5, %6 : vector<8x15xf32>
    %c0_6 = arith.constant 0 : index
    %c0_7 = arith.constant 0 : index
    %8 = vector.load %arg4[%c0_6, %c0_7] : memref<1x15xf32, #tpu.memory_space<vmem>>, vector<1x15xf32>
    %9 = vector.broadcast %8 : vector<1x15xf32> to vector<8x15xf32>
    %10 = arith.mulf %7, %9 : vector<8x15xf32>
    %cst_8 = arith.constant dense<0.000000e+00> : vector<8xf32>
    %11 = vector.multi_reduction <add>, %10, %cst_8 [1] : vector<8x15xf32> to vector<8xf32>
    %12 = vector.shape_cast %11 : vector<8xf32> to vector<8x1xf32>
    %c0_9 = arith.constant 0 : index
    %13 = memref.load %arg5[%c0_9] : memref<1xf32, #tpu.memory_space<smem>>
    %14 = vector.broadcast %13 : f32 to vector<8x1xf32>
    %15 = arith.addf %12, %14 : vector<8x1xf32>
    %c0_10 = arith.constant 0 : index
    %c0_11 = arith.constant 0 : index
    %16 = vector.load %arg6[%c0_10, %c0_11] : memref<8x1xf32, #tpu.memory_space<vmem>>, vector<8x1xf32>
    tpu.vector_store %arg6[%c0_10, %c0_11], %15 {strides = array<i32>} : memref<8x1xf32, #tpu.memory_space<vmem>>, vector<8x1xf32>,
    return
  }
  func.func @transform_0(%arg0: i32) -> (i32, i32) {
    %c0_i32 = arith.constant 0 : i32
    %c0_i32_0 = arith.constant 0 : i32
    return %arg0, %c0_i32 : i32, i32
  }
  func.func @transform_1(%arg0: i32) -> (i32, i32) {
    %c0_i32 = arith.constant 0 : i32
    %c0_i32_0 = arith.constant 0 : i32
    %c0_i32_1 = arith.constant 0 : i32
    return %c0_i32, %c0_i32_0 : i32, i32
  }
  func.func @transform_2(%arg0: i32) -> (i32, i32) {
    %c0_i32 = arith.constant 0 : i32
    %c0_i32_0 = arith.constant 0 : i32
    %c0_i32_1 = arith.constant 0 : i32
    return %c0_i32, %c0_i32_0 : i32, i32
  }
  func.func @transform_3(%arg0: i32) -> (i32, i32) {
    %c0_i32 = arith.constant 0 : i32
    %c0_i32_0 = arith.constant 0 : i32
    %c0_i32_1 = arith.constant 0 : i32
    return %c0_i32, %c0_i32_0 : i32, i32
  }
  func.func @transform_4(%arg0: i32) -> i32 {
    %c0_i32 = arith.constant 0 : i32
    %c0_i32_0 = arith.constant 0 : i32
    return %c0_i32 : i32
  }
  func.func @transform_5(%arg0: i32) -> (i32, i32) {
    %c0_i32 = arith.constant 0 : i32
    %c0_i32_0 = arith.constant 0 : i32
    return %arg0, %c0_i32 : i32, i32
  }
}

</mosaic_0001>

<llo_original>
// kernel: tpu_custom_call.1
$region0: #{tpu_custom_call.1}
  #allocation0 [shape = 'u32[]', space=smem, size = 0x4, offset = 0x4, fixed_abs, tag = 'smem constant byte address 0x4 - core index']
  #allocation1 [shape = 'u32[144,128]{1,0:T(1,128)}', space=vmem, size = 0x12000, scoped, tag = 'internal scratch']
  #allocation2 [shape = 'f32[1]{0:T(128)S(6)}', space=smem, size = 0x200, scoped, tag = 'scoped memory for tpu_custom_call.1']
  %s0 = inlined_call_operand.vmem [shape: f32[8,32], index: 0, kind: input, shape index: {}]
  %s1 = inlined_call_operand.vmem [shape: f32[32,15], index: 1, kind: input, shape index: {}]
  %s2 = inlined_call_operand.vmem [shape: f32[1,15], index: 2, kind: input, shape index: {}]
  %s3 = inlined_call_operand.vmem [shape: f32[1,15], index: 3, kind: input, shape index: {}]
  %s4 = inlined_call_operand.<no memory space> [shape: f32[1], index: 4, kind: input, shape index: {}]
  %s5 = inlined_call_operand.vmem [shape: f32[8,1], index: 5, kind: output, shape index: {}]
  %s6 = sld [smem:[#allocation0]]
  $region30: #{tpu_custom_call.1} parent=0
    _
  %s8 = ssub.s32 1, %s6
  %s9 = scalar_select 0, %s8, %s6
  %10 = sst [smem:[#allocation2]] %s4
  // Predicated region
  $region2: #{tpu_custom_call.1} parent=0 // pred_check
    _
  $region3: #{tpu_custom_call.1} parent=0 // pred_check_branch
    %12 = sbr.rel (0) target = $region5
  $region4: #{tpu_custom_call.1} parent=0 // pred_region
    _
  $region5: #{tpu_custom_call.1} parent=0 // pred_fallthru
    _
  // Predicated region
  $region6: #{tpu_custom_call.1} parent=0 // pred_check
    _
  $region7: #{tpu_custom_call.1} parent=0 // pred_check_branch
    %14 = sbr.rel (0) target = $region9
  $region8: #{tpu_custom_call.1} parent=0 // pred_region
    _
  $region9: #{tpu_custom_call.1} parent=0 // pred_fallthru
    _
  // Predicated region
  $region10: #{tpu_custom_call.1} parent=0 // pred_check
    _
  $region11: #{tpu_custom_call.1} parent=0 // pred_check_branch
    %16 = sbr.rel (0) target = $region13
  $region12: #{tpu_custom_call.1} parent=0 // pred_region
    _
  $region13: #{tpu_custom_call.1} parent=0 // pred_fallthru
    _
  // Predicated region
  $region14: #{tpu_custom_call.1} parent=0 // pred_check
    _
  $region15: #{tpu_custom_call.1} parent=0 // pred_check_branch
    %18 = sbr.rel (0) target = $region17
  $region16: #{tpu_custom_call.1} parent=0 // pred_region
    _
  $region17: #{tpu_custom_call.1} parent=0 // pred_fallthru
    _
  // Predicated region
  $region18: #{tpu_custom_call.1} parent=0 // pred_check
    _
  $region19: #{tpu_custom_call.1} parent=0 // pred_check_branch
    %20 = sbr.rel (0) target = $region21
  $region20: #{tpu_custom_call.1} parent=0 // pred_region
    _
  $region21: #{tpu_custom_call.1} parent=0 // pred_fallthru
    _
  %v21 = vld [vmem:[%s0] sm:$0xff]
  %v22 = vld [vmem:[%s1] sm:$0xff]
  %v23 = vld [vmem:[%s1 + $0x8] sm:$0xff]
  %v24 = vld [vmem:[%s1 + $0x10] sm:$0xff]
  %v25 = vld [vmem:[%s1 + $0x18] sm:$0xff]
  %v26 = vld [vmem:[%s2] sm:$0x1]
  %v28 = vlaneseq
  %v29 = vshrl.u32 %v28, 7
  %v30 = vsub.s32 0, %v29
  %v31 = vrot.slane %v26, %v30
  %vm33 = vcmask 261120
  %v35 = vsel %vm33, %v21, 0
  %37 = vmatprep.subr.mxu0 0.0
  %38 = vmatpush1.msra.mxu0 %v22
  %39 = vmatprep.subr.mxu0 0.0
  %40 = vmatpush1.msra.mxu0 %v23
  %41 = vmatprep.subr.mxu0 0.0
  %42 = vmatpush1.msra.mxu0 %v24
  %43 = vmatprep.subr.mxu0 0.0
  %44 = vmatpush1.msra.mxu0 %v25
  %45 = vmatprep.subr.mxu0 0.0
  %46 = vmatpush1.msra.mxu0 0.0
  %47 = vmatprep.subr.mxu0 0.0
  %48 = vmatpush1.msra.mxu0 0.0
  %49 = vmatprep.subr.mxu0 0.0
  %50 = vmatpush1.msra.mxu0 0.0
  %51 = vmatprep.subr.mxu0 0.0
  %52 = vmatpush1.msra.mxu0 0.0
  %53 = vmatprep.subr.mxu0 0.0
  %54 = vmatpush1.msra.mxu0 0.0
  %55 = vmatprep.subr.mxu0 0.0
  %56 = vmatpush1.msra.mxu0 0.0
  %57 = vmatprep.subr.mxu0 0.0
  %58 = vmatpush1.msra.mxu0 0.0
  %59 = vmatprep.subr.mxu0 0.0
  %60 = vmatpush1.msra.mxu0 0.0
  %61 = vmatprep.subr.mxu0 0.0
  %62 = vmatpush1.msra.mxu0 0.0
  %63 = vmatprep.subr.mxu0 0.0
  %64 = vmatpush1.msra.mxu0 0.0
  %65 = vmatprep.subr.mxu0 0.0
  %66 = vmatpush1.msra.mxu0 0.0
  %67 = vmatprep.subr.mxu0 0.0
  %68 = vmatpush1.msra.mxu0 0.0
  %69 = vmatprep.subr.mxu0 0.0
  %70 = vmatpush1.msra.mxu0 0.0
  %71 = vmatprep.subr.mxu0 0.0
  %72 = vmatpush1.msra.mxu0 0.0
  %73 = vmatprep.subr.mxu0 0.0
  %74 = vmatpush1.msra.mxu0 0.0
  %75 = vmatprep.subr.mxu0 0.0
  %76 = vmatpush1.msra.mxu0 0.0
  %77 = vmatprep.subr.mxu0 0.0
  %78 = vmatpush1.msra.mxu0 0.0
  %79 = vmatprep.subr.mxu0 0.0
  %80 = vmatpush1.msra.mxu0 0.0
  %81 = vmatprep.subr.mxu0 0.0
  %82 = vmatpush1.msra.mxu0 0.0
  %83 = vmatprep.subr.mxu0 0.0
  %84 = vmatpush1.msra.mxu0 0.0
  %85 = vmatprep.subr.mxu0 0.0
  %86 = vmatpush1.msra.mxu0 0.0
  %87 = vmatprep.subr.mxu0 0.0
  %88 = vmatpush1.msra.mxu0 0.0
  %89 = vmatprep.subr.mxu0 0.0
  %90 = vmatpush1.msra.mxu0 0.0
  %91 = vmatprep.subr.mxu0 0.0
  %92 = vmatpush1.msra.mxu0 0.0
  %93 = vmatprep.subr.mxu0 0.0
  %94 = vmatpush1.msra.mxu0 0.0
  %95 = vmatprep.subr.mxu0 0.0
  %96 = vmatpush1.msra.mxu0 0.0
  %97 = vmatprep.subr.mxu0 0.0
  %98 = vmatpush1.msra.mxu0 0.0
  %99 = vmatprep.subr.mxu0 0.0
  %100 = vmatpush1.msra.mxu0 0.0
  %101 = vmatprep.mubr.f32.mxu0 0.0
  %102 = vmatmul.mubr.f32.gmra.mrb[0].mxu0 %v35
  %v103 = vpop.f32.mrb[0].mxu0
  %v104 = vadd.f32 %v31, %v103
  %v105 = vpop.f32.mrb[0].mxu0
  %106 = vdwg.mxu0
  %v107 = vmax.f32 %v104, 0.0
  %v108 = vld [vmem:[%s3] sm:$0x1]
  %v110 = vlaneseq
  %v111 = vshrl.u32 %v110, 7
  %v112 = vsub.s32 0, %v111
  %v113 = vrot.slane %v108, %v112
  %v115 = vmul.f32 %v107, %v113
  %vm116 = vcmask 121856
  %v117 = vsel %vm116, %v115, 0.0
  %118 = vadd.xlane.f32.xlu0 %v117
  %v119 = vpop.xlane.xlu0 %118
  %s120 = sld [smem:[#allocation2]]
  %v121 = vstv %s120
  %v122 = vadd.f32 %v119, %v121
  %vm123 = vcmask 7168
  %124 = vst.msk [vmem:[%s5] sm:$0xff] %vm123, %v122
  // Predicated region
  $region22: #{tpu_custom_call.1} parent=0 // pred_check
    _
  $region23: #{tpu_custom_call.1} parent=0 // pred_check_branch
    %126 = sbr.rel (0) target = $region25
  $region24: #{tpu_custom_call.1} parent=0 // pred_region
    _
  $region25: #{tpu_custom_call.1} parent=0 // pred_fallthru
    _
  // Predicated region
  $region26: #{tpu_custom_call.1} parent=0 // pred_check
    _
  $region27: #{tpu_custom_call.1} parent=0 // pred_check_branch
    %128 = sbr.rel (0) target = $region29
  $region28: #{tpu_custom_call.1} parent=0 // pred_region
    _
  $region29: #{tpu_custom_call.1} parent=0 // pred_fallthru
    _

</llo_original>
